<compile_context>
chip_gen: v7x
topology: tpu7x:2x2x1
jax: 0.10.0
libtpu: 0.0.40
codegen_flags: <defaults>
</compile_context>

<pallas_src>
import functools

import jax
import jax.numpy as jnp
from jax.experimental import pallas as pl
from jax.experimental.pallas import tpu as pltpu


def _round_up(x, m):
    return ((x + m - 1) // m) * m


# ----------------------------------------------------------------------------
# Stage 1: PointNet encoder + per-block conditioning. One grid step per batch.
#   Output cc has shape (B, n_blocks, 1, 3H); cc[:, 0] already contains fc_p's
#   bias folded in (done in fuse_decoder_params).
# ----------------------------------------------------------------------------
def _encoder_cond_kernel(x_ref, ew1, eb1, ew2, eb2, fcc_w, fcc_b, cc_ref,
                         *, n_blocks):
    x = x_ref[0]                                                      # (M, 8) bf16
    h = jnp.dot(x, ew1[...], preferred_element_type=jnp.float32) + eb1[...]
    h = jnp.maximum(h, 0.0)
    h = jnp.dot(h.astype(jnp.bfloat16), ew2[...],
                preferred_element_type=jnp.float32) + eb2[...]
    # TODO(synk): for very large point clouds, tile M with a masked running-max
    # accumulator initialized to -inf (zero-padded rows must be masked to -inf).
    c = jnp.max(h, axis=0, keepdims=True).astype(jnp.bfloat16)        # (1, c_dim)
    for i in range(n_blocks):
        cc_ref[i] = jnp.dot(c, fcc_w[i],
                            preferred_element_type=jnp.float32) + fcc_b[i]


# ----------------------------------------------------------------------------
# Stage 2: fused 3-head decoder trunk (block-diagonal, hidden = 3*H = 96).
#   grid = (B, num_query_tiles); both axes are embarrassingly parallel.
# ----------------------------------------------------------------------------
def _decoder_kernel(p_ref, cc_ref, fcp_w, b0w, b0b, b1w, b1b, ow, ob, o_ref,
                    *, n_blocks):
    p = p_ref[0]                                                      # (TILE_N, 8) bf16
    # cc_ref[0] already holds fc_p bias + cc_0 (folded outside the kernel).
    net = jnp.dot(p, fcp_w[...], preferred_element_type=jnp.float32) + cc_ref[0]
    for i in range(n_blocks):
        if i > 0:
            net = net + cc_ref[i]                                     # (1, 3H) bcast
        h = jnp.maximum(net, 0.0)
        h = jnp.dot(h.astype(jnp.bfloat16), b0w[i],
                    preferred_element_type=jnp.float32) + b0b[i]
        h = jnp.maximum(h, 0.0)
        dx = jnp.dot(h.astype(jnp.bfloat16), b1w[i],
                     preferred_element_type=jnp.float32) + b1b[i]
        net = net + dx                                                # identity shortcut

    out = jnp.dot(jnp.maximum(net, 0.0).astype(jnp.bfloat16), ow[...],
                  preferred_element_type=jnp.float32) + ob[...]       # (TILE_N, 8)

    # Head activations on the fused 8-wide slab:
    #   col 0   -> qual  (sigmoid)
    #   col 1:5 -> rot   (L2-normalize over the 4 rot columns ONLY)
    #   col 5   -> width (identity)
    #   col 6:8 -> zero padding
    col = jax.lax.broadcasted_iota(jnp.int32, out.shape, 1)
    is_qual = col == 0
    is_rot = jnp.logical_and(col >= 1, col <= 4)
    is_width = col == 5
    sig = jax.nn.sigmoid(out)
    rot_sq = jnp.where(is_rot, out * out, 0.0)
    # +1e-24 keeps padded (near-zero) query rows finite; those rows are sliced
    # away in the wrapper.  rsqrt rides the EUP slot (free under the MXU).
    inv_n = jax.lax.rsqrt(jnp.sum(rot_sq, axis=-1, keepdims=True) + 1e-24)
    res = jnp.where(is_qual, sig,
                    jnp.where(is_rot, out * inv_n,
                              jnp.where(is_width, out, 0.0)))
    o_ref[0] = res


def fused_forward(inputs, p, enc_params, dec_params, *, n_blocks, max_tile_n=2048):
    """inputs: (B, M, 3) point cloud; p: (B, N, 3) query points."""
    B, M, _ = inputs.shape
    _, N, _ = p.shape

    tile_n = min(max_tile_n, _round_up(N, 16))
    n_pad = _round_up(N, tile_n)

    # bf16 streams halve HBM traffic and feed the MXU directly; coordinate dim
    # zero-padded 3 -> 8 so no K=3 matmul passes are needed (weights padded too).
    p_pad = jnp.zeros((B, n_pad, 8), jnp.bfloat16).at[:, :N, :3].set(
        p.astype(jnp.bfloat16))
    x_pad = jnp.zeros((B, M, 8), jnp.bfloat16).at[:, :, :3].set(
        inputs.astype(jnp.bfloat16))

    ew1, eb1, ew2, eb2 = enc_params
    (fcp_w, fcc_w, fcc_b, b0w, b0b, b1w, b1b, ow, ob) = dec_params
    h3 = fcp_w.shape[1]

    # ---- stage 1: encoder + conditioning (microseconds of work) -------------
    def efull(a):
        nd = a.ndim
        return pl.BlockSpec(a.shape, lambda b, _n=nd: (0,) * _n)

    cc = pl.pallas_call(
        functools.partial(_encoder_cond_kernel, n_blocks=n_blocks),
        out_shape=jax.ShapeDtypeStruct((B, n_blocks, 1, h3), jnp.float32),
        grid_spec=pltpu.PrefetchScalarGridSpec(
            num_scalar_prefetch=0,
            grid=(B,),
            in_specs=[
                pl.BlockSpec((1, M, 8), lambda b: (b, 0, 0)),          # point cloud
                efull(ew1), efull(eb1), efull(ew2), efull(eb2),
                efull(fcc_w), efull(fcc_b),
            ],
            out_specs=pl.BlockSpec((None, n_blocks, 1, h3),
                                   lambda b: (b, 0, 0, 0)),
        ),
        compiler_params=pltpu.CompilerParams(
            dimension_semantics=("parallel",),
        ),
    )(x_pad, ew1, eb1, ew2, eb2, fcc_w, fcc_b)

    # ---- stage 2: fused 3-head decoder over query tiles ---------------------
    def dfull(a):
        nd = a.ndim
        return pl.BlockSpec(a.shape, lambda b, nt, _n=nd: (0,) * _n)

    out = pl.pallas_call(
        functools.partial(_decoder_kernel, n_blocks=n_blocks),
        out_shape=jax.ShapeDtypeStruct((B, n_pad, 8), jnp.float32),
        grid_spec=pltpu.PrefetchScalarGridSpec(
            num_scalar_prefetch=0,
            grid=(B, n_pad // tile_n),
            in_specs=[
                pl.BlockSpec((1, tile_n, 8), lambda b, nt: (b, nt, 0)),     # queries
                pl.BlockSpec((None, n_blocks, 1, h3),
                             lambda b, nt: (b, 0, 0, 0)),                   # conditioning
                dfull(fcp_w), dfull(b0w), dfull(b0b), dfull(b1w), dfull(b1b),
                dfull(ow), dfull(ob),
            ],
            out_specs=pl.BlockSpec((1, tile_n, 8), lambda b, nt: (b, nt, 0)),
        ),
        compiler_params=pltpu.CompilerParams(
            # No cross-tile scratch anymore -> both axes fully parallel
            # (shards across both TensorCores on v7x even at B=1).
            dimension_semantics=("parallel", "parallel"),
            # Sized against v7x's 64 MiB VMEM; weights <1 MiB, blocks <1 MiB.
            vmem_limit_bytes=32 * 1024 * 1024,
        ),
    )(p_pad, cc, fcp_w, b0w, b0b, b1w, b1b, ow, ob)

    qual = out[:, :N, 0]
    rot = out[:, :N, 1:5]
    width = out[:, :N, 5]
    return qual, rot, width


# ----------------------------------------------------------------------------
# Deterministic parameter construction (per-head f32 "reference" params)
# ----------------------------------------------------------------------------
def _linear(key, fan_in, fan_out):
    kw, kb = jax.random.split(key)
    scale = 1.0 / jnp.sqrt(jnp.float32(fan_in))
    w = jax.random.normal(kw, (fan_in, fan_out), jnp.float32) * scale
    b = jax.random.normal(kb, (1, fan_out), jnp.float32) * 0.01
    return w, b


def make_encoder_params(key, c_dim, enc_hidden):
    k1, k2 = jax.random.split(key)
    w1, b1 = _linear(k1, 3, enc_hidden)
    w2, b2 = _linear(k2, enc_hidden, c_dim)
    return (w1, b1, w2, b2)


def make_decoder_params(key, c_dim, hidden, n_blocks, out_dim):
    keys = jax.random.split(key, 2 + 3 * n_blocks)
    fcp_w, fcp_b = _linear(keys[0], 3, hidden)
    out_w, out_b = _linear(keys[1], hidden, out_dim)
    fcc_w, fcc_b, b0w, b0b, b1w, b1b = [], [], [], [], [], []
    for i in range(n_blocks):
        w, b = _linear(keys[2 + 3 * i], c_dim, hidden); fcc_w.append(w); fcc_b.append(b)
        w, b = _linear(keys[3 + 3 * i], hidden, hidden); b0w.append(w); b0b.append(b)
        w, b = _linear(keys[4 + 3 * i], hidden, hidden); b1w.append(w); b1b.append(b)
    stack = lambda xs: jnp.stack(xs, axis=0)
    return (fcp_w, fcp_b, stack(fcc_w), stack(fcc_b),
            stack(b0w), stack(b0b), stack(b1w), stack(b1b), out_w, out_b)


# ----------------------------------------------------------------------------
# Fusion of the 3 heads into one block-diagonal 96-wide trunk (bf16 weights)
# ----------------------------------------------------------------------------
def fuse_encoder_params(enc_params):
    w1, b1, w2, b2 = enc_params
    w1p = jnp.pad(w1, ((0, 8 - w1.shape[0]), (0, 0)))          # K=3 -> K=8
    return (w1p.astype(jnp.bfloat16), b1, w2.astype(jnp.bfloat16), b2)


def fuse_decoder_params(dec_qual, dec_rot, dec_width, hidden):
    heads = [dec_qual, dec_rot, dec_width]
    H = hidden

    # fc_p : concat heads along output dim, pad K from 3 -> 8.
    fcp_w = jnp.concatenate([h[0] for h in heads], axis=1)               # (3, 3H)
    fcp_w = jnp.pad(fcp_w, ((0, 5), (0, 0)))                             # (8, 3H)
    fcp_b = jnp.concatenate([h[1] for h in heads], axis=1)               # (1, 3H)

    # fc_c : concat along output dim; fold fc_p's bias into the first
    # conditioning bias so the decoder kernel does one fewer add per tile.
    fcc_w = jnp.concatenate([h[2] for h in heads], axis=2)               # (nb, c, 3H)
    fcc_b = jnp.concatenate([h[3] for h in heads], axis=2)               # (nb, 1, 3H)
    fcc_b = fcc_b.at[0].add(fcp_b)

    # ResNet block weights: block-diagonal so the heads stay independent.
    # TODO(synk): a 4th (tsdf) head would slot into this same trunk (96 -> 128).
    def blockdiag(ws):                                                   # 3x (nb,H,H)
        zeros = jnp.zeros_like(ws[0])
        rows = []
        for r in range(3):
            rows.append(jnp.concatenate(
                [ws[c] if c == r else zeros for c in range(3)], axis=2))
        return jnp.concatenate(rows, axis=1)                             # (nb,3H,3H)

    b0w = blockdiag([h[4] for h in heads])
    b0b = jnp.concatenate([h[5] for h in heads], axis=2)
    b1w = blockdiag([h[6] for h in heads])
    b1b = jnp.concatenate([h[7] for h in heads], axis=2)

    # fc_out : lane-dense 8-wide slab -> cols [qual | rot(4) | width | 0 | 0].
    out_w = jnp.zeros((3 * H, 8), jnp.float32)
    out_w = out_w.at[0:H, 0:1].set(heads[0][8])
    out_w = out_w.at[H:2 * H, 1:5].set(heads[1][8])
    out_w = out_w.at[2 * H:3 * H, 5:6].set(heads[2][8])
    out_b = jnp.zeros((1, 8), jnp.float32)
    out_b = out_b.at[:, 0:1].set(heads[0][9])
    out_b = out_b.at[:, 1:5].set(heads[1][9])
    out_b = out_b.at[:, 5:6].set(heads[2][9])

    bf = lambda a: a.astype(jnp.bfloat16)
    return (bf(fcp_w), bf(fcc_w), fcc_b,
            bf(b0w), b0b, bf(b1w), b1b, bf(out_w), out_b)


# ----------------------------------------------------------------------------
# ConvolutionalOccupancyNetwork (forward pass only, JAX/Pallas)
# ----------------------------------------------------------------------------
class ConvolutionalOccupancyNetworkPallas:
    def __init__(self, key, c_dim=32, hidden=32, enc_hidden=32, n_blocks=3):
        k_enc, k_q, k_r, k_w = jax.random.split(key, 4)
        self.hidden = hidden
        self.n_blocks = n_blocks
        # per-head f32 parameters (used by the pure-JAX reference)
        self.encoder_params = make_encoder_params(k_enc, c_dim, enc_hidden)
        self.dec_qual = make_decoder_params(k_q, c_dim, hidden, n_blocks, 1)
        self.dec_rot = make_decoder_params(k_r, c_dim, hidden, n_blocks, 4)
        self.dec_width = make_decoder_params(k_w, c_dim, hidden, n_blocks, 1)
        # fused bf16 parameters used by the two Pallas stages
        self._enc_fused = fuse_encoder_params(self.encoder_params)
        self._dec_fused = fuse_decoder_params(self.dec_qual, self.dec_rot,
                                              self.dec_width, hidden)

    def forward(self, inputs, p, p_tsdf=None):
        # TODO(synk): optional 4th (tsdf) decoder / p_tsdf branch not instantiated.
        return fused_forward(inputs, p, self._enc_fused, self._dec_fused,
                             n_blocks=self.n_blocks)


# ----------------------------------------------------------------------------
# Pure-JAX reference (same math, bf16-emulated matmul operands) for sanity
# ----------------------------------------------------------------------------
def _bf(x):
    return x.astype(jnp.bfloat16).astype(jnp.float32)


def _mm(x, w):
    return jnp.dot(_bf(x), _bf(w), preferred_element_type=jnp.float32)


def _ref_forward(model, inputs, p):
    w1, b1, w2, b2 = model.encoder_params
    h = jnp.maximum(_mm(inputs, w1) + b1, 0.0)
    c = jnp.max(_mm(h, w2) + b2, axis=1)                                 # (B, c_dim)

    def dec(params, head):
        (fcp_w, fcp_b, fcc_w, fcc_b, b0w, b0b, b1w, b1b, ow, ob) = params
        net = _mm(p, fcp_w) + fcp_b
        for i in range(fcc_w.shape[0]):
            net = net + (_mm(c, fcc_w[i]) + fcc_b[i])[:, None, :]
            hh = _mm(jnp.maximum(net, 0.0), b0w[i]) + b0b[i]
            dx = _mm(jnp.maximum(hh, 0.0), b1w[i]) + b1b[i]
            net = net + dx
        out = _mm(jnp.maximum(net, 0.0), ow) + ob
        if head == "qual":
            out = jax.nn.sigmoid(out)
        elif head == "rot":
            out = out / jnp.maximum(
                jnp.sqrt(jnp.sum(out * out, axis=-1, keepdims=True)), 1e-12)
        if out.shape[-1] == 1:
            out = out[..., 0]
        return out

    return (dec(model.dec_qual, "qual"),
            dec(model.dec_rot, "rot"),
            dec(model.dec_width, "width"))


if __name__ == "__main__":
    key = jax.random.PRNGKey(0)
    k_model, k_in, k_p = jax.random.split(key, 3)

    B, M, N = 2, 64, 8          # batch, input points, query points
    model = ConvolutionalOccupancyNetworkPallas(k_model, c_dim=32, hidden=32,
                                                enc_hidden=32, n_blocks=3)

    inputs = jax.random.normal(k_in, (B, M, 3), jnp.float32)
    p = jax.random.uniform(k_p, (B, N, 3), jnp.float32, minval=-0.5, maxval=0.5)

    qual, rot, width = model.forward(inputs, p)
    jax.block_until_ready((qual, rot, width))

    assert qual.shape == (B, N)
    assert rot.shape == (B, N, 4)
    assert width.shape == (B, N)

    q_ref, r_ref, w_ref = _ref_forward(model, inputs, p)
    assert jnp.allclose(qual, q_ref, atol=2e-2, rtol=2e-2)
    assert jnp.allclose(rot, r_ref, atol=2e-2, rtol=2e-2)
    assert jnp.allclose(width, w_ref, atol=2e-2, rtol=2e-2)
    assert jnp.allclose(jnp.linalg.norm(rot, axis=-1), 1.0, atol=1e-3)

    print("KERNEL_OK")
</pallas_src>

<mosaic_0001>
module attributes {stable_mosaic.version = 11 : i64} {
  func.func @_encoder_cond_kernel(%arg0: i32, %arg1: memref<1x64x8xbf16, #tpu.memory_space<vmem>>, %arg2: memref<8x32xbf16, #tpu.memory_space<vmem>>, %arg3: memref<1x32xf32, #tpu.memory_space<vmem>>, %arg4: memref<32x32xbf16, #tpu.memory_space<vmem>>, %arg5: memref<1x32xf32, #tpu.memory_space<vmem>>, %arg6: memref<3x32x96xbf16, #tpu.memory_space<vmem>>, %arg7: memref<3x1x96xf32, #tpu.memory_space<vmem>>, %arg8: memref<1x3x1x96xf32, #tpu.memory_space<vmem>>) attributes {dimension_semantics = [#tpu.dimension_semantics<parallel>], iteration_bounds = array<i64: 2>, scalar_prefetch = 0 : i64, scratch_operands = 0 : i64, tpu.core_type = #tpu.core_type<tc>, window_params = [{transform_indices = @transform_0, window_bounds = array<i64: 1, 64, 8>}, {pipeline_mode = #tpu.pipeline_mode<synchronous>, transform_indices = @transform_1, window_bounds = array<i64: 8, 32>}, {pipeline_mode = #tpu.pipeline_mode<synchronous>, transform_indices = @transform_2, window_bounds = array<i64: 1, 32>}, {pipeline_mode = #tpu.pipeline_mode<synchronous>, transform_indices = @transform_3, window_bounds = array<i64: 32, 32>}, {pipeline_mode = #tpu.pipeline_mode<synchronous>, transform_indices = @transform_4, window_bounds = array<i64: 1, 32>}, {pipeline_mode = #tpu.pipeline_mode<synchronous>, transform_indices = @transform_5, window_bounds = array<i64: 3, 32, 96>}, {pipeline_mode = #tpu.pipeline_mode<synchronous>, transform_indices = @transform_6, window_bounds = array<i64: 3, 1, 96>}, {transform_indices = @transform_7, window_bounds = array<i64: 1, 3, 1, 96>}]} {
    %c0 = arith.constant 0 : index
    %c0_0 = arith.constant 0 : index
    %c0_1 = arith.constant 0 : index
    %0 = vector.load %arg1[%c0, %c0_0, %c0_1] : memref<1x64x8xbf16, #tpu.memory_space<vmem>>, vector<1x64x8xbf16>
    %1 = vector.shape_cast %0 : vector<1x64x8xbf16> to vector<64x8xbf16>
    %c0_2 = arith.constant 0 : index
    %c0_3 = arith.constant 0 : index
    %2 = vector.load %arg2[%c0_2, %c0_3] : memref<8x32xbf16, #tpu.memory_space<vmem>>, vector<8x32xbf16>
    %cst = arith.constant dense<0.000000e+00> : vector<64x32xf32>
    %3 = tpu.matmul %1, %2, %cst {dimension_numbers = #tpu.dot_dimension_numbers<[1], [0], [0], [1], [0, 0, 1, 1], [], []>} : vector<64x8xbf16>, vector<8x32xbf16>, vector<64x32xf32> -> vector<64x32xf32>
    %c0_4 = arith.constant 0 : index
    %c0_5 = arith.constant 0 : index
    %4 = vector.load %arg3[%c0_4, %c0_5] : memref<1x32xf32, #tpu.memory_space<vmem>>, vector<1x32xf32>
    %5 = vector.broadcast %4 : vector<1x32xf32> to vector<64x32xf32>
    %6 = arith.addf %3, %5 : vector<64x32xf32>
    %cst_6 = arith.constant 0.000000e+00 : f32
    %7 = vector.broadcast %cst_6 : f32 to vector<64x32xf32>
    %8 = arith.maximumf %6, %7 : vector<64x32xf32>
    %9 = arith.truncf %8 : vector<64x32xf32> to vector<64x32xbf16>
    %c0_7 = arith.constant 0 : index
    %c0_8 = arith.constant 0 : index
    %10 = vector.load %arg4[%c0_7, %c0_8] : memref<32x32xbf16, #tpu.memory_space<vmem>>, vector<32x32xbf16>
    %cst_9 = arith.constant dense<0.000000e+00> : vector<64x32xf32>
    %11 = tpu.matmul %9, %10, %cst_9 {dimension_numbers = #tpu.dot_dimension_numbers<[1], [0], [0], [1], [0, 0, 1, 1], [], []>} : vector<64x32xbf16>, vector<32x32xbf16>, vector<64x32xf32> -> vector<64x32xf32>
    %c0_10 = arith.constant 0 : index
    %c0_11 = arith.constant 0 : index
    %12 = vector.load %arg5[%c0_10, %c0_11] : memref<1x32xf32, #tpu.memory_space<vmem>>, vector<1x32xf32>
    %13 = vector.broadcast %12 : vector<1x32xf32> to vector<64x32xf32>
    %14 = arith.addf %11, %13 : vector<64x32xf32>
    %cst_12 = arith.constant dense<0xFF800000> : vector<32xf32>
    %15 = vector.multi_reduction <maximumf>, %14, %cst_12 [0] : vector<64x32xf32> to vector<32xf32>
    %16 = vector.shape_cast %15 : vector<32xf32> to vector<1x32xf32>
    %17 = arith.truncf %16 : vector<1x32xf32> to vector<1x32xbf16>
    %c0_13 = arith.constant 0 : index
    %c0_14 = arith.constant 0 : index
    %c0_15 = arith.constant 0 : index
    %18 = vector.load %arg6[%c0_13, %c0_14, %c0_15] : memref<3x32x96xbf16, #tpu.memory_space<vmem>>, vector<1x32x96xbf16>
    %19 = vector.shape_cast %18 : vector<1x32x96xbf16> to vector<32x96xbf16>
    %cst_16 = arith.constant dense<0.000000e+00> : vector<1x96xf32>
    %20 = tpu.matmul %17, %19, %cst_16 {dimension_numbers = #tpu.dot_dimension_numbers<[1], [0], [0], [1], [0, 0, 1, 1], [], []>} : vector<1x32xbf16>, vector<32x96xbf16>, vector<1x96xf32> -> vector<1x96xf32>
    %c0_17 = arith.constant 0 : index
    %c0_18 = arith.constant 0 : index
    %c0_19 = arith.constant 0 : index
    %21 = vector.load %arg7[%c0_17, %c0_18, %c0_19] : memref<3x1x96xf32, #tpu.memory_space<vmem>>, vector<1x1x96xf32>
    %22 = vector.shape_cast %21 : vector<1x1x96xf32> to vector<1x96xf32>
    %23 = arith.addf %20, %22 : vector<1x96xf32>
    %c0_20 = arith.constant 0 : index
    %c0_21 = arith.constant 0 : index
    %c0_22 = arith.constant 0 : index
    %c0_23 = arith.constant 0 : index
    %24 = vector.load %arg8[%c0_20, %c0_21, %c0_22, %c0_23] : memref<1x3x1x96xf32, #tpu.memory_space<vmem>>, vector<1x1x1x96xf32>
    %25 = vector.shape_cast %24 : vector<1x1x1x96xf32> to vector<1x96xf32>
    %26 = vector.shape_cast %23 : vector<1x96xf32> to vector<1x1x1x96xf32>
    tpu.vector_store %arg8[%c0_20, %c0_21, %c0_22, %c0_23], %26 {strides = array<i32>} : memref<1x3x1x96xf32, #tpu.memory_space<vmem>>, vector<1x1x1x96xf32>,
    %c1 = arith.constant 1 : index
    %c0_24 = arith.constant 0 : index
    %c0_25 = arith.constant 0 : index
    %27 = vector.load %arg6[%c1, %c0_24, %c0_25] : memref<3x32x96xbf16, #tpu.memory_space<vmem>>, vector<1x32x96xbf16>
    %28 = vector.shape_cast %27 : vector<1x32x96xbf16> to vector<32x96xbf16>
    %cst_26 = arith.constant dense<0.000000e+00> : vector<1x96xf32>
    %29 = tpu.matmul %17, %28, %cst_26 {dimension_numbers = #tpu.dot_dimension_numbers<[1], [0], [0], [1], [0, 0, 1, 1], [], []>} : vector<1x32xbf16>, vector<32x96xbf16>, vector<1x96xf32> -> vector<1x96xf32>
    %c1_27 = arith.constant 1 : index
    %c0_28 = arith.constant 0 : index
    %c0_29 = arith.constant 0 : index
    %30 = vector.load %arg7[%c1_27, %c0_28, %c0_29] : memref<3x1x96xf32, #tpu.memory_space<vmem>>, vector<1x1x96xf32>
    %31 = vector.shape_cast %30 : vector<1x1x96xf32> to vector<1x96xf32>
    %32 = arith.addf %29, %31 : vector<1x96xf32>
    %c0_30 = arith.constant 0 : index
    %c1_31 = arith.constant 1 : index
    %c0_32 = arith.constant 0 : index
    %c0_33 = arith.constant 0 : index
    %33 = vector.load %arg8[%c0_30, %c1_31, %c0_32, %c0_33] : memref<1x3x1x96xf32, #tpu.memory_space<vmem>>, vector<1x1x1x96xf32>
    %34 = vector.shape_cast %33 : vector<1x1x1x96xf32> to vector<1x96xf32>
    %35 = vector.shape_cast %32 : vector<1x96xf32> to vector<1x1x1x96xf32>
    tpu.vector_store %arg8[%c0_30, %c1_31, %c0_32, %c0_33], %35 {strides = array<i32>} : memref<1x3x1x96xf32, #tpu.memory_space<vmem>>, vector<1x1x1x96xf32>,
    %c2 = arith.constant 2 : index
    %c0_34 = arith.constant 0 : index
    %c0_35 = arith.constant 0 : index
    %36 = vector.load %arg6[%c2, %c0_34, %c0_35] : memref<3x32x96xbf16, #tpu.memory_space<vmem>>, vector<1x32x96xbf16>
    %37 = vector.shape_cast %36 : vector<1x32x96xbf16> to vector<32x96xbf16>
    %cst_36 = arith.constant dense<0.000000e+00> : vector<1x96xf32>
    %38 = tpu.matmul %17, %37, %cst_36 {dimension_numbers = #tpu.dot_dimension_numbers<[1], [0], [0], [1], [0, 0, 1, 1], [], []>} : vector<1x32xbf16>, vector<32x96xbf16>, vector<1x96xf32> -> vector<1x96xf32>
    %c2_37 = arith.constant 2 : index
    %c0_38 = arith.constant 0 : index
    %c0_39 = arith.constant 0 : index
    %39 = vector.load %arg7[%c2_37, %c0_38, %c0_39] : memref<3x1x96xf32, #tpu.memory_space<vmem>>, vector<1x1x96xf32>
    %40 = vector.shape_cast %39 : vector<1x1x96xf32> to vector<1x96xf32>
    %41 = arith.addf %38, %40 : vector<1x96xf32>
    %c0_40 = arith.constant 0 : index
    %c2_41 = arith.constant 2 : index
    %c0_42 = arith.constant 0 : index
    %c0_43 = arith.constant 0 : index
    %42 = vector.load %arg8[%c0_40, %c2_41, %c0_42, %c0_43] : memref<1x3x1x96xf32, #tpu.memory_space<vmem>>, vector<1x1x1x96xf32>
    %43 = vector.shape_cast %42 : vector<1x1x1x96xf32> to vector<1x96xf32>
    %44 = vector.shape_cast %41 : vector<1x96xf32> to vector<1x1x1x96xf32>
    tpu.vector_store %arg8[%c0_40, %c2_41, %c0_42, %c0_43], %44 {strides = array<i32>} : memref<1x3x1x96xf32, #tpu.memory_space<vmem>>, vector<1x1x1x96xf32>,
    return
  }
  func.func @transform_0(%arg0: i32) -> (i32, i32, i32) {
    %c0_i32 = arith.constant 0 : i32
    %c0_i32_0 = arith.constant 0 : i32
    %c0_i32_1 = arith.constant 0 : i32
    return %arg0, %c0_i32, %c0_i32_0 : i32, i32, i32
  }
  func.func @transform_1(%arg0: i32) -> (i32, i32) {
    %c0_i32 = arith.constant 0 : i32
    %c0_i32_0 = arith.constant 0 : i32
    %c0_i32_1 = arith.constant 0 : i32
    return %c0_i32, %c0_i32_0 : i32, i32
  }
  func.func @transform_2(%arg0: i32) -> (i32, i32) {
    %c0_i32 = arith.constant 0 : i32
    %c0_i32_0 = arith.constant 0 : i32
    %c0_i32_1 = arith.constant 0 : i32
    return %c0_i32, %c0_i32_0 : i32, i32
  }
  func.func @transform_3(%arg0: i32) -> (i32, i32) {
    %c0_i32 = arith.constant 0 : i32
    %c0_i32_0 = arith.constant 0 : i32
    %c0_i32_1 = arith.constant 0 : i32
    return %c0_i32, %c0_i32_0 : i32, i32
  }
  func.func @transform_4(%arg0: i32) -> (i32, i32) {
    %c0_i32 = arith.constant 0 : i32
    %c0_i32_0 = arith.constant 0 : i32
    %c0_i32_1 = arith.constant 0 : i32
    return %c0_i32, %c0_i32_0 : i32, i32
  }
  func.func @transform_5(%arg0: i32) -> (i32, i32, i32) {
    %c0_i32 = arith.constant 0 : i32
    %c0_i32_0 = arith.constant 0 : i32
    %c0_i32_1 = arith.constant 0 : i32
    %c0_i32_2 = arith.constant 0 : i32
    return %c0_i32, %c0_i32_0, %c0_i32_1 : i32, i32, i32
  }
  func.func @transform_6(%arg0: i32) -> (i32, i32, i32) {
    %c0_i32 = arith.constant 0 : i32
    %c0_i32_0 = arith.constant 0 : i32
    %c0_i32_1 = arith.constant 0 : i32
    %c0_i32_2 = arith.constant 0 : i32
    return %c0_i32, %c0_i32_0, %c0_i32_1 : i32, i32, i32
  }
  func.func @transform_7(%arg0: i32) -> (i32, i32, i32, i32) {
    %c0_i32 = arith.constant 0 : i32
    %c0_i32_0 = arith.constant 0 : i32
    %c0_i32_1 = arith.constant 0 : i32
    %c0_i32_2 = arith.constant 0 : i32
    return %arg0, %c0_i32, %c0_i32_0, %c0_i32_1 : i32, i32, i32, i32
  }
}

</mosaic_0001>

<llo_original>
// kernel: tpu_custom_call.1
$region0: #{tpu_custom_call.1}
  #allocation0 [shape = 'u32[]', space=smem, size = 0x4, offset = 0x4, fixed_abs, tag = 'smem constant byte address 0x4 - core index']
  #allocation1 [shape = 'u32[144,128]{1,0:T(1,128)}', space=vmem, size = 0x12000, scoped, tag = 'internal scratch']
  %s0 = inlined_call_operand.vmem [shape: bf16[2,64,8], index: 0, kind: input, shape index: {}]
  %s1 = inlined_call_operand.vmem [shape: bf16[8,32], index: 1, kind: input, shape index: {}]
  %s2 = inlined_call_operand.vmem [shape: f32[1,32], index: 2, kind: input, shape index: {}]
  %s3 = inlined_call_operand.vmem [shape: bf16[32,32], index: 3, kind: input, shape index: {}]
  %s4 = inlined_call_operand.vmem [shape: f32[1,32], index: 4, kind: input, shape index: {}]
  %s5 = inlined_call_operand.vmem [shape: bf16[3,32,96], index: 5, kind: input, shape index: {}]
  %s6 = inlined_call_operand.vmem [shape: f32[3,1,96], index: 6, kind: input, shape index: {}]
  %s7 = inlined_call_operand.hbm [shape: f32[2,3,1,96], index: 7, kind: output, shape index: {}]
  %s8 = sld [smem:[#allocation0]]
  $region61: #{tpu_custom_call.1} parent=0
    _
  %s10 = ssub.s32 1, %s8
  %s11 = scalar_select 0, %s10, %s8
  $region1: #{tpu_custom_call.1} parent=0
    #allocation2 [shape = 'u8[3072]{0}', space=vmem, size = 0xc00, scoped, tag = 'output window, operand 0']
    #allocation3 [shape = 's32[2]{0}', space=sflag, size = 0x8, scoped, tag = 'scoped memory for tpu_custom_call.1']
    %12 = vsyncpa [#allocation3], 0
    %s13 = scalar_lea.sflag [#allocation3], 1
    %14 = vsyncpa %s13, 0
    loop: start=0, step=1, limit=4
    $region2: #{tpu_custom_call.1} parent=1 // loop_pre_header
      _
    $region3: #{tpu_custom_call.1} parent=1 // loop_header
      %s16 = sphi 0, %s20
      %p17 = scmp.ge.s32.totalorder %s16, 4
      %s26 = sphi 0, %s28
      %s29 = sphi 0, %s26
      %s30 = sphi 0, %s29
      %s46 = sphi 0, %s30
      %s50 = sphi 0, %s50
      %s52 = sphi 0, %s50
      %s53 = sphi 0, %s52
      %s67 = sphi 0, %s53
      %s71 = sphi 0, %s71
      %s73 = sphi 0, %s71
      %s74 = sphi 0, %s73
      %s88 = sphi 0, %s74
      %s92 = sphi 0, %s92
      %s94 = sphi 0, %s92
      %s95 = sphi 0, %s94
      %s109 = sphi 0, %s95
      %s113 = sphi 0, %s113
      %s115 = sphi 0, %s113
      %s116 = sphi 0, %s115
      %s130 = sphi 0, %s116
      %s134 = sphi 0, %s134
      %s136 = sphi 0, %s134
      %s137 = sphi 0, %s136
      %s151 = sphi 0, %s137
      %s155 = sphi 0, %s155
      %s157 = sphi 0, %s155
      %s158 = sphi 0, %s157
      %s172 = sphi 0, %s158
      %s178 = sphi 0, %s180
      %s181 = sphi 0, %s178
      %s182 = sphi 0, %s181
      %s198 = sphi 0, %s182
    $region4: #{tpu_custom_call.1} parent=1 // loop_header_branch
      %19 = sbr.rel (%p17) target = $region8
    $region5: #{tpu_custom_call.1} parent=1 // loop_body
      %s21 = ssub.s32 %s16, 1
      %s22 = ssub.s32 %s16, 2
      %s23 = sadd.s32 %s16, 1
      %s24 = ssub.s32 %s16, %s23
      %p25 = scmp.eq.s32.totalorder %s24, 0
      %s27 = sadd.s32 %s26, 1
      %s28 = scalar_select %p25, %s26, %s27
      %p31 = pneg %p25
      %p32 = scmp.eq.s32.totalorder %s16, 1
      %p33 = por %p31, %p32
      %p34 = scmp.ne.s32.totalorder %s26, %s29
      %p35 = scmp.eq.s32.totalorder %s16, 0
      %p36 = por %p34, %p35
      %p37 = scmp.ne.s32.totalorder %s26, %s29
      %p38 = scmp.eq.s32.totalorder %s21, 1
      %p39 = por %p37, %p38
      %p40 = scmp.ne.s32.totalorder %s29, %s30
      %p41 = scmp.eq.s32.totalorder %s21, 0
      %p42 = por %p40, %p41
      %p43 = scmp.ne.s32.totalorder %s29, %s30
      %p44 = scmp.eq.s32.totalorder %s22, 1
      %p45 = por %p43, %p44
      %p47 = scmp.ne.s32.totalorder %s30, %s46
      %p48 = scmp.eq.s32.totalorder %s22, 0
      %p49 = por %p47, %p48
      %s51 = sadd.s32 %s50, 1
      %p54 = scmp.eq.s32.totalorder %s16, 1
      %p55 = scmp.ne.s32.totalorder %s50, %s52
      %p56 = scmp.eq.s32.totalorder %s16, 0
      %p57 = por %p55, %p56
      %p58 = scmp.ne.s32.totalorder %s50, %s52
      %p59 = scmp.eq.s32.totalorder %s21, 1
      %p60 = por %p58, %p59
      %p61 = scmp.ne.s32.totalorder %s52, %s53
      %p62 = scmp.eq.s32.totalorder %s21, 0
      %p63 = por %p61, %p62
      %p64 = scmp.ne.s32.totalorder %s52, %s53
      %p65 = scmp.eq.s32.totalorder %s22, 1
      %p66 = por %p64, %p65
      %p68 = scmp.ne.s32.totalorder %s53, %s67
      %p69 = scmp.eq.s32.totalorder %s22, 0
      %p70 = por %p68, %p69
      %s72 = sadd.s32 %s71, 1
      %p75 = scmp.eq.s32.totalorder %s16, 1
      %p76 = scmp.ne.s32.totalorder %s71, %s73
      %p77 = scmp.eq.s32.totalorder %s16, 0
      %p78 = por %p76, %p77
      %p79 = scmp.ne.s32.totalorder %s71, %s73
      %p80 = scmp.eq.s32.totalorder %s21, 1
      %p81 = por %p79, %p80
      %p82 = scmp.ne.s32.totalorder %s73, %s74
      %p83 = scmp.eq.s32.totalorder %s21, 0
      %p84 = por %p82, %p83
      %p85 = scmp.ne.s32.totalorder %s73, %s74
      %p86 = scmp.eq.s32.totalorder %s22, 1
      %p87 = por %p85, %p86
      %p89 = scmp.ne.s32.totalorder %s74, %s88
      %p90 = scmp.eq.s32.totalorder %s22, 0
      %p91 = por %p89, %p90
      %s93 = sadd.s32 %s92, 1
      %p96 = scmp.eq.s32.totalorder %s16, 1
      %p97 = scmp.ne.s32.totalorder %s92, %s94
      %p98 = scmp.eq.s32.totalorder %s16, 0
      %p99 = por %p97, %p98
      %p100 = scmp.ne.s32.totalorder %s92, %s94
      %p101 = scmp.eq.s32.totalorder %s21, 1
      %p102 = por %p100, %p101
      %p103 = scmp.ne.s32.totalorder %s94, %s95
      %p104 = scmp.eq.s32.totalorder %s21, 0
      %p105 = por %p103, %p104
      %p106 = scmp.ne.s32.totalorder %s94, %s95
      %p107 = scmp.eq.s32.totalorder %s22, 1
      %p108 = por %p106, %p107
      %p110 = scmp.ne.s32.totalorder %s95, %s109
      %p111 = scmp.eq.s32.totalorder %s22, 0
      %p112 = por %p110, %p111
      %s114 = sadd.s32 %s113, 1
      %p117 = scmp.eq.s32.totalorder %s16, 1
      %p118 = scmp.ne.s32.totalorder %s113, %s115
      %p119 = scmp.eq.s32.totalorder %s16, 0
      %p120 = por %p118, %p119
      %p121 = scmp.ne.s32.totalorder %s113, %s115
      %p122 = scmp.eq.s32.totalorder %s21, 1
      %p123 = por %p121, %p122
      %p124 = scmp.ne.s32.totalorder %s115, %s116
      %p125 = scmp.eq.s32.totalorder %s21, 0
      %p126 = por %p124, %p125
      %p127 = scmp.ne.s32.totalorder %s115, %s116
      %p128 = scmp.eq.s32.totalorder %s22, 1
      %p129 = por %p127, %p128
      %p131 = scmp.ne.s32.totalorder %s116, %s130
      %p132 = scmp.eq.s32.totalorder %s22, 0
      %p133 = por %p131, %p132
      %s135 = sadd.s32 %s134, 1
      %p138 = scmp.eq.s32.totalorder %s16, 1
      %p139 = scmp.ne.s32.totalorder %s134, %s136
      %p140 = scmp.eq.s32.totalorder %s16, 0
      %p141 = por %p139, %p140
      %p142 = scmp.ne.s32.totalorder %s134, %s136
      %p143 = scmp.eq.s32.totalorder %s21, 1
      %p144 = por %p142, %p143
      %p145 = scmp.ne.s32.totalorder %s136, %s137
      %p146 = scmp.eq.s32.totalorder %s21, 0
      %p147 = por %p145, %p146
      %p148 = scmp.ne.s32.totalorder %s136, %s137
      %p149 = scmp.eq.s32.totalorder %s22, 1
      %p150 = por %p148, %p149
      %p152 = scmp.ne.s32.totalorder %s137, %s151
      %p153 = scmp.eq.s32.totalorder %s22, 0
      %p154 = por %p152, %p153
      %s156 = sadd.s32 %s155, 1
      %p159 = scmp.eq.s32.totalorder %s16, 1
      %p160 = scmp.ne.s32.totalorder %s155, %s157
      %p161 = scmp.eq.s32.totalorder %s16, 0
      %p162 = por %p160, %p161
      %p163 = scmp.ne.s32.totalorder %s155, %s157
      %p164 = scmp.eq.s32.totalorder %s21, 1
      %p165 = por %p163, %p164
      %p166 = scmp.ne.s32.totalorder %s157, %s158
      %p167 = scmp.eq.s32.totalorder %s21, 0
      %p168 = por %p166, %p167
      %p169 = scmp.ne.s32.totalorder %s157, %s158
      %p170 = scmp.eq.s32.totalorder %s22, 1
      %p171 = por %p169, %p170
      %p173 = scmp.ne.s32.totalorder %s158, %s172
      %p174 = scmp.eq.s32.totalorder %s22, 0
      %p175 = por %p173, %p174
      %s176 = ssub.s32 %s16, %s23
      %p177 = scmp.eq.s32.totalorder %s176, 0
      %s179 = sadd.s32 %s178, 1
      %s180 = scalar_select %p177, %s178, %s179
      %p183 = pneg %p177
      %p184 = scmp.eq.s32.totalorder %s16, 1
      %p185 = por %p183, %p184
      %p186 = scmp.ne.s32.totalorder %s178, %s181
      %p187 = scmp.eq.s32.totalorder %s16, 0
      %p188 = por %p186, %p187
      %p189 = scmp.ne.s32.totalorder %s178, %s181
      %p190 = scmp.eq.s32.totalorder %s21, 1
      %p191 = por %p189, %p190
      %p192 = scmp.ne.s32.totalorder %s181, %s182
      %p193 = scmp.eq.s32.totalorder %s21, 0
      %p194 = por %p192, %p193
      %p195 = scmp.ne.s32.totalorder %s181, %s182
      %p196 = scmp.eq.s32.totalorder %s22, 1
      %p197 = por %p195, %p196
      %p199 = scmp.ne.s32.totalorder %s182, %s198
      %p200 = scmp.eq.s32.totalorder %s22, 0
      %p201 = por %p199, %p200
      %p202 = scmp.le.s32.totalorder 1, %s16
      %p203 = scmp.lt.s32.totalorder %s16, 3
      %p204 = pnand %p202, %p203
      %p205 = pneg %p204
      // Predicated region
      $region9: #{tpu_custom_call.1} parent=5 // pred_check
        _
      $region10: #{tpu_custom_call.1} parent=5 // pred_check_branch
        %207 = sbr.rel (%p204) target = $region12
      $region11: #{tpu_custom_call.1} parent=5 // pred_region
        %s208 = ssub.s32 %s16, 1
        // Predicated region
        $region13: #{tpu_custom_call.1} parent=11 // pred_check
          %p209 = pneg %p63
        $region14: #{tpu_custom_call.1} parent=11 // pred_check_branch
          %211 = sbr.rel (%p209) target = $region16
        $region15: #{tpu_custom_call.1} parent=11 // pred_region
          _
        $region16: #{tpu_custom_call.1} parent=11 // pred_fallthru
          _
        // Predicated region
        $region17: #{tpu_custom_call.1} parent=11 // pred_check
          %p212 = pneg %p84
        $region18: #{tpu_custom_call.1} parent=11 // pred_check_branch
          %214 = sbr.rel (%p212) target = $region20
        $region19: #{tpu_custom_call.1} parent=11 // pred_region
          _
        $region20: #{tpu_custom_call.1} parent=11 // pred_fallthru
          _
        // Predicated region
        $region21: #{tpu_custom_call.1} parent=11 // pred_check
          %p215 = pneg %p105
        $region22: #{tpu_custom_call.1} parent=11 // pred_check_branch
          %217 = sbr.rel (%p215) target = $region24
        $region23: #{tpu_custom_call.1} parent=11 // pred_region
          _
        $region24: #{tpu_custom_call.1} parent=11 // pred_fallthru
          _
        // Predicated region
        $region25: #{tpu_custom_call.1} parent=11 // pred_check
          %p218 = pneg %p126
        $region26: #{tpu_custom_call.1} parent=11 // pred_check_branch
          %220 = sbr.rel (%p218) target = $region28
        $region27: #{tpu_custom_call.1} parent=11 // pred_region
          _
        $region28: #{tpu_custom_call.1} parent=11 // pred_fallthru
          _
        // Predicated region
        $region29: #{tpu_custom_call.1} parent=11 // pred_check
          %p221 = pneg %p147
        $region30: #{tpu_custom_call.1} parent=11 // pred_check_branch
          %223 = sbr.rel (%p221) target = $region32
        $region31: #{tpu_custom_call.1} parent=11 // pred_region
          _
        $region32: #{tpu_custom_call.1} parent=11 // pred_fallthru
          _
        // Predicated region
        $region33: #{tpu_custom_call.1} parent=11 // pred_check
          %p224 = pneg %p168
        $region34: #{tpu_custom_call.1} parent=11 // pred_check_branch
          %226 = sbr.rel (%p224) target = $region36
        $region35: #{tpu_custom_call.1} parent=11 // pred_region
          _
        $region36: #{tpu_custom_call.1} parent=11 // pred_fallthru
          _
      $region12: #{tpu_custom_call.1} parent=5 // pred_fallthru
        _
      %p227 = scmp.lt.s32.totalorder %s16, 2
      // Predicated region
      $region37: #{tpu_custom_call.1} parent=5 // pred_check
        %p228 = pneg %p227
      $region38: #{tpu_custom_call.1} parent=5 // pred_check_branch
        %230 = sbr.rel (%p228) target = $region40
      $region39: #{tpu_custom_call.1} parent=5 // pred_region
        // Predicated region
        $region41: #{tpu_custom_call.1} parent=39 // pred_check
          %p231 = pneg %p36
        $region42: #{tpu_custom_call.1} parent=39 // pred_check_branch
          %233 = sbr.rel (%p231) target = $region44
        $region43: #{tpu_custom_call.1} parent=39 // pred_region
          %p234 = scmp.lt.s32.totalorder %s16, 1
          %s235 = scalar_select %p234, %s16, 1
          %s236 = smul.addr %s235, 8
          %s237 = smul.addr %s236, 4
          %s238 = scalar_lea.vmem %s0, %s237
        $region44: #{tpu_custom_call.1} parent=39 // pred_fallthru
          _
      $region40: #{tpu_custom_call.1} parent=5 // pred_fallthru
        _
      %p239 = scmp.le.s32.totalorder 1, %s16
      %p240 = scmp.lt.s32.totalorder %s16, 3
      %p241 = pnand %p239, %p240
      %p242 = pneg %p241
      // Predicated region
      $region45: #{tpu_custom_call.1} parent=5 // pred_check
        _
      $region46: #{tpu_custom_call.1} parent=5 // pred_check_branch
        %244 = sbr.rel (%p241) target = $region48
      $region47: #{tpu_custom_call.1} parent=5 // pred_region
        %s245 = ssub.s32 %s16, 1
        %p246 = scmp.lt.s32.totalorder %s21, 1
        %s247 = scalar_select %p246, %s21, 1
        %s248 = smul.addr %s247, 8
        %s249 = smul.addr %s248, 4
        %s250 = scalar_lea.vmem %s0, %s249
        %p251 = pneg %p42
        %p252 = pneg %p39
        %p253 = pneg %p63
        %p254 = pneg %p60
        %p255 = pneg %p84
        %p256 = pneg %p81
        %p257 = pneg %p105
        %p258 = pneg %p102
        %p259 = pneg %p126
        %p260 = pneg %p123
        %p261 = pneg %p147
        %p262 = pneg %p144
        %p263 = pneg %p168
        %p264 = pneg %p165
        %p265 = pneg %p194
        %p266 = pneg %p191
        %s267 = sand.u32 %s181, 1
        %s268 = scalar_lea.sflag [#allocation3], %s267
        %s269 = sand.u32 %s181, 1
        %s270 = smul.addr %s269, 3
        %s271 = scalar_lea.vmem [#allocation2], %s270
        %p272 = scmp.lt.s32.totalorder %s21, 1
        %s273 = scalar_select %p272, %s21, 1
        %s274 = smul.addr %s273, 8
        %s275 = smul.addr %s274, 4
        %s276 = scalar_lea.vmem %s0, %s275
        %v278 = vld [vmem:[%s276] sm:$0xf]
        %v279 = vld [vmem:[%s276 + $0x4] sm:$0xf]
        %v280 = vld [vmem:[%s276 + $0x8] sm:$0xf]
        %v281 = vld [vmem:[%s276 + $0xc] sm:$0xf]
        %v282 = vld [vmem:[%s276 + $0x10] sm:$0xf]
        %v283 = vld [vmem:[%s276 + $0x14] sm:$0xf]
        %v284 = vld [vmem:[%s276 + $0x18] sm:$0xf]
        %v285 = vld [vmem:[%s276 + $0x1c] sm:$0xf]
        %v286 = vld [vmem:[%s1] sm:$0xf]
        %v287 = vld [vmem:[%s2] sm:$0x1]
        %v289 = vlaneseq
        %v290 = vshrl.u32 %v289, 7
        %v291 = vsub.s32 0, %v290
        %v292 = vrot.slane %v287, %v291
        %v302 = vunpack.c.l.b16 %v278
        %v303 = vunpack.c.l.b16 %v279
        %v304 = vunpack.c.l.b16 %v280
        %v305 = vunpack.c.l.b16 %v281
        %v306 = vunpack.c.l.b16 %v282
        %v307 = vunpack.c.l.b16 %v283
        %v308 = vunpack.c.l.b16 %v284
        %v309 = vunpack.c.l.b16 %v285
        %v310 = vpack.c.b16 %v303, %v302
        %v311 = vpack.c.b16 %v305, %v304
        %v312 = vpack.c.b16 %v307, %v306
        %v313 = vpack.c.b16 %v309, %v308
        %vm314 = vcmask 64512
        %v316 = vsel %vm314, %v310, 0
        %v319 = vsel %vm314, %v311, 0
        %v322 = vsel %vm314, %v312, 0
        %v325 = vsel %vm314, %v313, 0
        %vm327 = vcmask 1043456
        %v329 = vsel %vm327, %v286, 0
        %331 = vmatprep.subr.bf16.mxu0 0
        %332 = vmatpush1.bf16.msra.mxu0 %v329
        %333 = vmatprep.subr.bf16.mxu0 0
        %334 = vmatpush1.bf16.msra.mxu0 0
        %335 = vmatprep.subr.bf16.mxu0 0
        %336 = vmatpush1.bf16.msra.mxu0 0
        %337 = vmatprep.subr.bf16.mxu0 0
        %338 = vmatpush1.bf16.msra.mxu0 0
        %339 = vmatprep.subr.bf16.mxu0 0
        %340 = vmatpush1.bf16.msra.mxu0 0
        %341 = vmatprep.subr.bf16.mxu0 0
        %342 = vmatpush1.bf16.msra.mxu0 0
        %343 = vmatprep.subr.bf16.mxu0 0
        %344 = vmatpush1.bf16.msra.mxu0 0
        %345 = vmatprep.subr.bf16.mxu0 0
        %346 = vmatpush1.bf16.msra.mxu0 0
        %347 = vmatprep.subr.bf16.mxu0 0
        %348 = vmatpush1.bf16.msra.mxu0 0
        %349 = vmatprep.subr.bf16.mxu0 0
        %350 = vmatpush1.bf16.msra.mxu0 0
        %351 = vmatprep.subr.bf16.mxu0 0
        %352 = vmatpush1.bf16.msra.mxu0 0
        %353 = vmatprep.subr.bf16.mxu0 0
        %354 = vmatpush1.bf16.msra.mxu0 0
        %355 = vmatprep.subr.bf16.mxu0 0
        %356 = vmatpush1.bf16.msra.mxu0 0
        %357 = vmatprep.subr.bf16.mxu0 0
        %358 = vmatpush1.bf16.msra.mxu0 0
        %359 = vmatprep.subr.bf16.mxu0 0
        %360 = vmatpush1.bf16.msra.mxu0 0
        %361 = vmatprep.subr.bf16.mxu0 0
        %362 = vmatpush1.bf16.msra.mxu0 0
        %363 = vmatprep.mubr.bf16.mxu0 0
        %364 = vmatmul.mubr.bf16.gmra.mrb[0].mxu0 %v316
        %v365 = vpop.f32.mrb[0].mxu0
        %v366 = vadd.f32 %v292, %v365
        %v367 = vpop.f32.mrb[0].mxu0
        %v368 = vpop.f32.mrb[0].mxu0
        %v369 = vadd.f32 %v292, %v368
        %v370 = vpop.f32.mrb[0].mxu0
        %371 = vmatprep.mubr.bf16.mxu0 0
        %372 = vmatmul.mubr.bf16.gmra.mrb[0].mxu0 %v319
        %v373 = vpop.f32.mrb[0].mxu0
        %v374 = vadd.f32 %v292, %v373
        %v375 = vpop.f32.mrb[0].mxu0
        %v376 = vpop.f32.mrb[0].mxu0
        %v377 = vadd.f32 %v292, %v376
        %v378 = vpop.f32.mrb[0].mxu0
        %379 = vmatprep.mubr.bf16.mxu0 0
        %380 = vmatmul.mubr.bf16.gmra.mrb[0].mxu0 %v322
        %v381 = vpop.f32.mrb[0].mxu0
        %v382 = vadd.f32 %v292, %v381
        %v383 = vpop.f32.mrb[0].mxu0
        %v384 = vpop.f32.mrb[0].mxu0
        %v385 = vadd.f32 %v292, %v384
        %v386 = vpop.f32.mrb[0].mxu0
        %387 = vmatprep.mubr.bf16.mxu0 0
        %388 = vmatmul.mubr.bf16.gmra.mrb[0].mxu0 %v325
        %v389 = vpop.f32.mrb[0].mxu0
        %v390 = vadd.f32 %v292, %v389
        %v391 = vpop.f32.mrb[0].mxu0
        %v392 = vpop.f32.mrb[0].mxu0
        %v393 = vadd.f32 %v292, %v392
        %v394 = vpop.f32.mrb[0].mxu0
        %395 = vdwg.mxu0
        %v396 = vmax.f32 %v366, 0.0
        %v397 = vmax.f32 %v369, 0.0
        %v398 = vmax.f32 %v374, 0.0
        %v399 = vmax.f32 %v377, 0.0
        %v400 = vmax.f32 %v382, 0.0
        %v401 = vmax.f32 %v385, 0.0
        %v402 = vmax.f32 %v390, 0.0
        %v403 = vmax.f32 %v393, 0.0
        %v404 = vpack.c.bf16 %v397, %v396
        %v405 = vpack.c.bf16 %v399, %v398
        %v406 = vpack.c.bf16 %v401, %v400
        %v407 = vpack.c.bf16 %v403, %v402
        %v408 = vld [vmem:[%s3] sm:$0xf]
        %v409 = vld [vmem:[%s3 + $0x4] sm:$0xf]
        %v410 = vld [vmem:[%s3 + $0x8] sm:$0xf]
        %v411 = vld [vmem:[%s3 + $0xc] sm:$0xf]
        %v412 = vld [vmem:[%s4] sm:$0x1]
        %v414 = vlaneseq
        %v415 = vshrl.u32 %v414, 7
        %v416 = vsub.s32 0, %v415
        %v417 = vrot.slane %v412, %v416
        %v423 = vunpack.c.l.b16 %v408
        %v424 = vunpack.c.l.b16 %v409
        %v425 = vunpack.c.l.b16 %v410
        %v426 = vunpack.c.l.b16 %v411
        %v427 = vpack.c.b16 %v424, %v423
        %v428 = vpack.c.b16 %v426, %v425
        %vm431 = vcmask 261120
        %v433 = vsel %vm431, %v404, 0
        %v436 = vsel %vm431, %v405, 0
        %v439 = vsel %vm431, %v406, 0
        %v442 = vsel %vm431, %v407, 0
        %444 = vmatprep.subr.bf16.mxu0 0
        %445 = vmatpush1.bf16.msra.mxu0 %v427
        %446 = vmatprep.subr.bf16.mxu0 0
        %447 = vmatpush1.bf16.msra.mxu0 %v428
        %448 = vmatprep.subr.bf16.mxu0 0
        %449 = vmatpush1.bf16.msra.mxu0 0
        %450 = vmatprep.subr.bf16.mxu0 0
        %451 = vmatpush1.bf16.msra.mxu0 0
        %452 = vmatprep.subr.bf16.mxu0 0
        %453 = vmatpush1.bf16.msra.mxu0 0
        %454 = vmatprep.subr.bf16.mxu0 0
        %455 = vmatpush1.bf16.msra.mxu0 0
        %456 = vmatprep.subr.bf16.mxu0 0
        %457 = vmatpush1.bf16.msra.mxu0 0
        %458 = vmatprep.subr.bf16.mxu0 0
        %459 = vmatpush1.bf16.msra.mxu0 0
        %460 = vmatprep.subr.bf16.mxu0 0
        %461 = vmatpush1.bf16.msra.mxu0 0
        %462 = vmatprep.subr.bf16.mxu0 0
        %463 = vmatpush1.bf16.msra.mxu0 0
        %464 = vmatprep.subr.bf16.mxu0 0
        %465 = vmatpush1.bf16.msra.mxu0 0
        %466 = vmatprep.subr.bf16.mxu0 0
        %467 = vmatpush1.bf16.msra.mxu0 0
        %468 = vmatprep.subr.bf16.mxu0 0
        %469 = vmatpush1.bf16.msra.mxu0 0
        %470 = vmatprep.subr.bf16.mxu0 0
        %471 = vmatpush1.bf16.msra.mxu0 0
        %472 = vmatprep.subr.bf16.mxu0 0
        %473 = vmatpush1.bf16.msra.mxu0 0
        %474 = vmatprep.subr.bf16.mxu0 0
        %475 = vmatpush1.bf16.msra.mxu0 0
        %476 = vmatprep.mubr.bf16.mxu0 0
        %477 = vmatmul.mubr.bf16.gmra.mrb[0].mxu0 %v433
        %v478 = vpop.f32.mrb[0].mxu0
        %v479 = vadd.f32 %v417, %v478
        %v480 = vpop.f32.mrb[0].mxu0
        %v481 = vpop.f32.mrb[0].mxu0
        %v482 = vadd.f32 %v417, %v481
        %v483 = vpop.f32.mrb[0].mxu0
        %484 = vmatprep.mubr.bf16.mxu0 0
        %485 = vmatmul.mubr.bf16.gmra.mrb[0].mxu0 %v436
        %v486 = vpop.f32.mrb[0].mxu0
        %v487 = vadd.f32 %v417, %v486
        %v488 = vpop.f32.mrb[0].mxu0
        %v489 = vpop.f32.mrb[0].mxu0
        %v490 = vadd.f32 %v417, %v489
        %v491 = vpop.f32.mrb[0].mxu0
        %492 = vmatprep.mubr.bf16.mxu0 0
        %493 = vmatmul.mubr.bf16.gmra.mrb[0].mxu0 %v439
        %v494 = vpop.f32.mrb[0].mxu0
        %v495 = vadd.f32 %v417, %v494
        %v496 = vpop.f32.mrb[0].mxu0
        %v497 = vpop.f32.mrb[0].mxu0
        %v498 = vadd.f32 %v417, %v497
        %v499 = vpop.f32.mrb[0].mxu0
        %500 = vmatprep.mubr.bf16.mxu0 0
        %501 = vmatmul.mubr.bf16.gmra.mrb[0].mxu0 %v442
        %v502 = vpop.f32.mrb[0].mxu0
        %v503 = vadd.f32 %v417, %v502
        %v504 = vpop.f32.mrb[0].mxu0
        %v505 = vpop.f32.mrb[0].mxu0
        %v506 = vadd.f32 %v417, %v505
        %v507 = vpop.f32.mrb[0].mxu0
        %508 = vdwg.mxu0
        %v509 = vsel %vm431, %v479, -inf
        %v510 = vsel %vm431, %v482, -inf
        %v511 = vsel %vm431, %v487, -inf
        %v512 = vsel %vm431, %v490, -inf
        %v513 = vsel %vm431, %v495, -inf
        %v514 = vmax.f32 %v509, %v513
        %v515 = vsel %vm431, %v498, -inf
        %v516 = vmax.f32 %v510, %v515
        %v517 = vsel %vm431, %v503, -inf
        %v518 = vmax.f32 %v511, %v517
        %v519 = vsel %vm431, %v506, -inf
        %v520 = vmax.f32 %v512, %v519
        %v521 = vmax.f32 %v514, %v516
        %v522 = vmax.f32 %v518, %v520
        %v523 = vmax.f32 %v521, %v522
        %v524 = vrot.slane %v523, 4
        %v525 = vmax.f32 %v523, %v524
        %v526 = vrot.slane %v525, 2
        %v527 = vmax.f32 %v525, %v526
        %v528 = vrot.slane %v527, 1
        %v529 = vmax.f32 %v527, %v528
        %v530 = vpack.c.bf16 %v529, %v529
        %v531 = vld [vmem:[%s5] sm:$0xf]
        %v532 = vld [vmem:[%s5 + $0x4] sm:$0xf]
        %v533 = vld [vmem:[%s5 + $0x8] sm:$0xf]
        %v534 = vld [vmem:[%s5 + $0xc] sm:$0xf]
        %v535 = vld [vmem:[%s6] sm:$0x1]
        %v540 = vunpack.c.l.b16 %v531
        %v541 = vunpack.c.l.b16 %v532
        %v542 = vunpack.c.l.b16 %v533
        %v543 = vunpack.c.l.b16 %v534
        %v544 = vpack.c.b16 %v541, %v540
        %v545 = vpack.c.b16 %v543, %v542
        %v549 = vsel %vm431, %v530, 0
        %551 = vmatprep.subr.bf16.mxu0 0
        %552 = vmatpush1.bf16.msra.mxu0 %v544
        %553 = vmatprep.subr.bf16.mxu0 0
        %554 = vmatpush1.bf16.msra.mxu0 %v545
        %555 = vmatprep.subr.bf16.mxu0 0
        %556 = vmatpush1.bf16.msra.mxu0 0
        %557 = vmatprep.subr.bf16.mxu0 0
        %558 = vmatpush1.bf16.msra.mxu0 0
        %559 = vmatprep.subr.bf16.mxu0 0
        %560 = vmatpush1.bf16.msra.mxu0 0
        %561 = vmatprep.subr.bf16.mxu0 0
        %562 = vmatpush1.bf16.msra.mxu0 0
        %563 = vmatprep.subr.bf16.mxu0 0
        %564 = vmatpush1.bf16.msra.mxu0 0
        %565 = vmatprep.subr.bf16.mxu0 0
        %566 = vmatpush1.bf16.msra.mxu0 0
        %567 = vmatprep.subr.bf16.mxu0 0
        %568 = vmatpush1.bf16.msra.mxu0 0
        %569 = vmatprep.subr.bf16.mxu0 0
        %570 = vmatpush1.bf16.msra.mxu0 0
        %571 = vmatprep.subr.bf16.mxu0 0
        %572 = vmatpush1.bf16.msra.mxu0 0
        %573 = vmatprep.subr.bf16.mxu0 0
        %574 = vmatpush1.bf16.msra.mxu0 0
        %575 = vmatprep.subr.bf16.mxu0 0
        %576 = vmatpush1.bf16.msra.mxu0 0
        %577 = vmatprep.subr.bf16.mxu0 0
        %578 = vmatpush1.bf16.msra.mxu0 0
        %579 = vmatprep.subr.bf16.mxu0 0
        %580 = vmatpush1.bf16.msra.mxu0 0
        %581 = vmatprep.subr.bf16.mxu0 0
        %582 = vmatpush1.bf16.msra.mxu0 0
        %583 = vmatprep.mubr.bf16.mxu0 0
        %584 = vmatmul.mubr.bf16.gmra.mrb[0].mxu0 %v549
        %v585 = vpop.f32.mrb[0].mxu0
        %v586 = vadd.f32 %v535, %v585
        %v587 = vpop.f32.mrb[0].mxu0
        %v588 = vpop.f32.mrb[0].mxu0
        %v589 = vpop.f32.mrb[0].mxu0
        %590 = vdwg.mxu0
        %vm591 = vcmask 778240
        %592 = vst.msk [vmem:[%s271] sm:$0x1] %vm591, %v586
        %s593 = scalar_lea.vmem %s5, 16
        %v594 = vld [vmem:[%s593] sm:$0xf]
        %v595 = vld [vmem:[%s593 + $0x4] sm:$0xf]
        %v596 = vld [vmem:[%s593 + $0x8] sm:$0xf]
        %v597 = vld [vmem:[%s593 + $0xc] sm:$0xf]
        %s598 = scalar_lea.vmem %s6, 1
        %v599 = vld [vmem:[%s598] sm:$0x1]
        %v604 = vunpack.c.l.b16 %v594
        %v605 = vunpack.c.l.b16 %v595
        %v606 = vunpack.c.l.b16 %v596
        %v607 = vunpack.c.l.b16 %v597
        %v608 = vpack.c.b16 %v605, %v604
        %v609 = vpack.c.b16 %v607, %v606
        %612 = vmatprep.subr.bf16.mxu0 0
        %613 = vmatpush1.bf16.msra.mxu0 %v608
        %614 = vmatprep.subr.bf16.mxu0 0
        %615 = vmatpush1.bf16.msra.mxu0 %v609
        %616 = vmatprep.subr.bf16.mxu0 0
        %617 = vmatpush1.bf16.msra.mxu0 0
        %618 = vmatprep.subr.bf16.mxu0 0
        %619 = vmatpush1.bf16.msra.mxu0 0
        %620 = vmatprep.subr.bf16.mxu0 0
        %621 = vmatpush1.bf16.msra.mxu0 0
        %622 = vmatprep.subr.bf16.mxu0 0
        %623 = vmatpush1.bf16.msra.mxu0 0
        %624 = vmatprep.subr.bf16.mxu0 0
        %625 = vmatpush1.bf16.msra.mxu0 0
        %626 = vmatprep.subr.bf16.mxu0 0
        %627 = vmatpush1.bf16.msra.mxu0 0
        %628 = vmatprep.subr.bf16.mxu0 0
        %629 = vmatpush1.bf16.msra.mxu0 0
        %630 = vmatprep.subr.bf16.mxu0 0
        %631 = vmatpush1.bf16.msra.mxu0 0
        %632 = vmatprep.subr.bf16.mxu0 0
        %633 = vmatpush1.bf16.msra.mxu0 0
        %634 = vmatprep.subr.bf16.mxu0 0
        %635 = vmatpush1.bf16.msra.mxu0 0
        %636 = vmatprep.subr.bf16.mxu0 0
        %637 = vmatpush1.bf16.msra.mxu0 0
        %638 = vmatprep.subr.bf16.mxu0 0
        %639 = vmatpush1.bf16.msra.mxu0 0
        %640 = vmatprep.subr.bf16.mxu0 0
        %641 = vmatpush1.bf16.msra.mxu0 0
        %642 = vmatprep.subr.bf16.mxu0 0
        %643 = vmatpush1.bf16.msra.mxu0 0
        %644 = vmatprep.mubr.bf16.mxu0 0
        %645 = vmatmul.mubr.bf16.gmra.mrb[0].mxu0 %v549
        %v646 = vpop.f32.mrb[0].mxu0
        %v647 = vadd.f32 %v599, %v646
        %v648 = vpop.f32.mrb[0].mxu0
        %v649 = vpop.f32.mrb[0].mxu0
        %v650 = vpop.f32.mrb[0].mxu0
        %651 = vdwg.mxu0
        %s652 = scalar_lea.vmem %s271, 1 [#allocation2]
        %653 = vst.msk [vmem:[%s652] sm:$0x1] %vm591, %v647
        %s654 = scalar_lea.vmem %s5, 32
        %v655 = vld [vmem:[%s654] sm:$0xf]
        %v656 = vld [vmem:[%s654 + $0x4] sm:$0xf]
        %v657 = vld [vmem:[%s654 + $0x8] sm:$0xf]
        %v658 = vld [vmem:[%s654 + $0xc] sm:$0xf]
        %s659 = scalar_lea.vmem %s6, 2
        %v660 = vld [vmem:[%s659] sm:$0x1]
        %v665 = vunpack.c.l.b16 %v655
        %v666 = vunpack.c.l.b16 %v656
        %v667 = vunpack.c.l.b16 %v657
        %v668 = vunpack.c.l.b16 %v658
        %v669 = vpack.c.b16 %v666, %v665
        %v670 = vpack.c.b16 %v668, %v667
        %673 = vmatprep.subr.bf16.mxu0 0
        %674 = vmatpush1.bf16.msra.mxu0 %v669
        %675 = vmatprep.subr.bf16.mxu0 0
        %676 = vmatpush1.bf16.msra.mxu0 %v670
        %677 = vmatprep.subr.bf16.mxu0 0
        %678 = vmatpush1.bf16.msra.mxu0 0
        %679 = vmatprep.subr.bf16.mxu0 0
        %680 = vmatpush1.bf16.msra.mxu0 0
        %681 = vmatprep.subr.bf16.mxu0 0
        %682 = vmatpush1.bf16.msra.mxu0 0
        %683 = vmatprep.subr.bf16.mxu0 0
        %684 = vmatpush1.bf16.msra.mxu0 0
        %685 = vmatprep.subr.bf16.mxu0 0
        %686 = vmatpush1.bf16.msra.mxu0 0
        %687 = vmatprep.subr.bf16.mxu0 0
        %688 = vmatpush1.bf16.msra.mxu0 0
        %689 = vmatprep.subr.bf16.mxu0 0
        %690 = vmatpush1.bf16.msra.mxu0 0
        %691 = vmatprep.subr.bf16.mxu0 0
        %692 = vmatpush1.bf16.msra.mxu0 0
        %693 = vmatprep.subr.bf16.mxu0 0
        %694 = vmatpush1.bf16.msra.mxu0 0
        %695 = vmatprep.subr.bf16.mxu0 0
        %696 = vmatpush1.bf16.msra.mxu0 0
        %697 = vmatprep.subr.bf16.mxu0 0
        %698 = vmatpush1.bf16.msra.mxu0 0
        %699 = vmatprep.subr.bf16.mxu0 0
        %700 = vmatpush1.bf16.msra.mxu0 0
        %701 = vmatprep.subr.bf16.mxu0 0
        %702 = vmatpush1.bf16.msra.mxu0 0
        %703 = vmatprep.subr.bf16.mxu0 0
        %704 = vmatpush1.bf16.msra.mxu0 0
        %705 = vmatprep.mubr.bf16.mxu0 0
        %706 = vmatmul.mubr.bf16.gmra.mrb[0].mxu0 %v549
        %v707 = vpop.f32.mrb[0].mxu0
        %v708 = vadd.f32 %v660, %v707
        %v709 = vpop.f32.mrb[0].mxu0
        %v710 = vpop.f32.mrb[0].mxu0
        %v711 = vpop.f32.mrb[0].mxu0
        %712 = vdwg.mxu0
        %s713 = scalar_lea.vmem %s271, 2 [#allocation2]
        %714 = vst.msk [vmem:[%s713] sm:$0x1] %vm591, %v708
        %s715 = sand.u32 %s181, 1
        %s716 = scalar_lea.sflag [#allocation3], %s715
        %s717 = sand.u32 %s181, 1
        %s718 = smul.addr %s717, 3
        %s719 = scalar_lea.vmem [#allocation2], %s718
        // Predicated region
        $region49: #{tpu_custom_call.1} parent=47 // pred_check
          %p720 = pneg %p191
        $region50: #{tpu_custom_call.1} parent=47 // pred_check_branch
          %722 = sbr.rel (%p720) target = $region52
        $region51: #{tpu_custom_call.1} parent=47 // pred_region
          %s724 = ssub.s32 48, 48
          %725 = vsyncadd %s716, %s724
          %s726 = smul.addr %s21, 3
          %s727 = smul.addr %s726, 16
          %s728 = scalar_lea.hbm %s7, %s727
          %s729 = sshll.u32 %s719, 4
          %s730 = int_to_ptr.vmem [resolvable:$true] %s729
          %735 = dma.vmem_to_hbm [thread:$0]  %s730, 48, %s728, %s716, 16, 16, 1
        $region52: #{tpu_custom_call.1} parent=47 // pred_fallthru
          _
      $region48: #{tpu_custom_call.1} parent=5 // pred_fallthru
        _
      %p736 = scmp.le.s32.totalorder 2, %s16
      // Predicated region
      $region53: #{tpu_custom_call.1} parent=5 // pred_check
        %p737 = pneg %p736
      $region54: #{tpu_custom_call.1} parent=5 // pred_check_branch
        %739 = sbr.rel (%p737) target = $region56
      $region55: #{tpu_custom_call.1} parent=5 // pred_region
        %s740 = ssub.s32 %s16, 2
        // Predicated region
        $region57: #{tpu_custom_call.1} parent=55 // pred_check
          %p741 = pneg %p197
        $region58: #{tpu_custom_call.1} parent=55 // pred_check_branch
          %743 = sbr.rel (%p741) target = $region60
        $region59: #{tpu_custom_call.1} parent=55 // pred_region
          %s744 = sand.u32 %s182, 1
          %s745 = scalar_lea.sflag [#allocation3], %s744
          %s746 = sand.u32 %s182, 1
          %s747 = smul.addr %s746, 3
          %s748 = scalar_lea.vmem [#allocation2], %s747
          %749 = dma.done %s745, 48
        $region60: #{tpu_custom_call.1} parent=55 // pred_fallthru
          _
      $region56: #{tpu_custom_call.1} parent=5 // pred_fallthru
        _
    $region6: #{tpu_custom_call.1} parent=1 // loop_footer
      %s20 = sadd.s32 1, %s16
    $region7: #{tpu_custom_call.1} parent=1 // loop_footer_branch
      %15 = sbr.rel target = $region3
    $region8: #{tpu_custom_call.1} parent=1 // loop_exit
      _
    %750 = vsyncpa [#allocation3], 1
    %s751 = scalar_lea.sflag [#allocation3], 1
    %752 = vsyncpa %s751, 1

</llo_original>
